<compile_context>
chip_gen: v6e
topology: v6e:2x2x1
jax: 0.10.0
libtpu: 0.0.40
codegen_flags: <defaults>
</compile_context>

<pallas_src>
import functools

import jax
import jax.numpy as jnp
from jax.experimental import pallas as pl
from jax.experimental.pallas import tpu as pltpu


def _round_up(x, m):
    return (x + m - 1) // m * m


def _ece_stats_kernel(logits_ref, labels_ref, stats_ref, *,
                      n_bins, bins_padded, total_n):
    i = pl.program_id(0)
    tile_rows, num_classes = logits_ref.shape

    x = logits_ref[...].astype(jnp.float32)                 # (T, C), math in f32
    labels = labels_ref[...]                                 # (T, 1) int32

    # Validity mask for the (possibly padded) edge tile.
    row = i * tile_rows + jax.lax.broadcasted_iota(jnp.int32, (tile_rows, 1), 0)
    valid = row < total_n                                     # (T, 1)

    # Softmax confidence: max prob == exp(0)/sum(exp(x - max)) == 1/denom (exact).
    row_max = jnp.max(x, axis=-1, keepdims=True)              # (T, 1)
    e = x - row_max                                           # reused below
    denom = jnp.sum(jnp.exp(e), axis=-1, keepdims=True)       # (T, 1)
    conf = 1.0 / denom                                        # (T, 1)

    # Argmax prediction (first max index, matches jnp.argmax) and accuracy.
    # Reuse e: e == 0 exactly at max positions (x - row_max == 0 in fp).
    col = jax.lax.broadcasted_iota(jnp.int32, x.shape, 1)
    pred = jnp.min(jnp.where(e == 0.0, col, num_classes),
                   axis=-1, keepdims=True)                    # (T, 1) int32
    acc = (pred == labels).astype(jnp.float32)                # (T, 1)

    # Padded rows may contain garbage/NaN: push conf outside every bin and
    # zero acc with WHERE (select), never arithmetic masking (NaN-safe).
    conf = jnp.where(valid, conf, -1.0)
    acc = jnp.where(valid, acc, 0.0)

    # Uniform bins (lower, upper], baked in as compile-time constants.
    # Bins are padded to a full 128-lane column; padded bins can never match
    # (lower >= 1.0 >= conf) so their counts are exactly zero.
    bcol = jax.lax.broadcasted_iota(
        jnp.int32, (1, bins_padded), 1).astype(jnp.float32)
    lowers = bcol / float(n_bins)
    uppers = (bcol + 1.0) / float(n_bins)
    in_bin = jnp.logical_and(conf > lowers, conf <= uppers).astype(jnp.float32)

    # Per-tile partial stats on the MXU, in its native orientation:
    #   lhs (8, T) lane-major over T (constant ones), rhs (T, BP) sublane-major.
    #   colsum(m)[r, b] = sum_n m[n, b]   (identical for every r).
    ones_lhs = jnp.ones((8, tile_rows), jnp.float32)

    def colsum(m):
        return jax.lax.dot_general(
            ones_lhs, m, (((1,), (0,)), ((), ())),
            preferred_element_type=jnp.float32)               # (8, BP)

    partial = jnp.concatenate(
        [colsum(in_bin),            # bin counts
         colsum(conf * in_bin),     # sum of confidences per bin
         colsum(acc * in_bin)],     # sum of accuracies per bin
        axis=-1)                                               # (8, 3*BP)

    stats_ref[...] = partial                                   # lane-dense store


def ece_loss(logits, labels, *, n_bins: int = 15, max_tile_rows=None):
    """Expected Calibration Error. logits: [N, C] (any float dtype), labels: [N] int."""
    n, c = logits.shape
    labels2d = labels.astype(jnp.int32).reshape(n, 1)

    itemsize = jnp.dtype(logits.dtype).itemsize
    bins_padded = _round_up(max(n_bins, 1), 128)

    # --- Byte-based row-tile sizing against a conservative VMEM working set ---
    # Per-row VMEM bytes (lane-padded):
    #   2 * C_pad * itemsize      double-buffered input block
    #   2 * C_pad * 4             f32 upcast (x - max) + exp temporaries
    #   2 * 128 * 4               labels (T,1) double-buffered, lane-padded
    #   4 * 128 * 4               bin-stage (T, 128) f32 intermediates
    c_pad = _round_up(c, 128)
    row_bytes = (2 * c_pad * itemsize + 2 * c_pad * 4
                 + 2 * 128 * 4 + 4 * 128 * 4)
    vmem_working_budget = 16 * 1024 * 1024
    tile_rows = max(8, (vmem_working_budget // row_bytes) // 8 * 8)
    if max_tile_rows is not None:
        tile_rows = max(8, min(tile_rows, _round_up(max_tile_rows, 8)))

    if tile_rows >= n:
        if n > 512:
            # Force >= 2 grid steps so v7x's two TensorCores both get work.
            tile_rows = _round_up(pl.cdiv(n, 2), 8)
        else:
            tile_rows = n                 # single full-extent block
    num_tiles = pl.cdiv(n, tile_rows)

    kernel = functools.partial(_ece_stats_kernel, n_bins=n_bins,
                               bins_padded=bins_padded, total_n=n)

    cost = pl.CostEstimate(
        flops=8 * n * c + 10 * n * bins_padded,
        transcendentals=n * c,
        bytes_accessed=n * c * itemsize + n * 4
                       + num_tiles * 8 * 3 * bins_padded * 4)

    stats = pl.pallas_call(
        kernel,
        out_shape=jax.ShapeDtypeStruct((num_tiles, 8, 3 * bins_padded),
                                       jnp.float32),
        grid_spec=pltpu.PrefetchScalarGridSpec(
            num_scalar_prefetch=0,
            grid=(num_tiles,),
            in_specs=[
                pl.BlockSpec((tile_rows, c), lambda i: (i, 0)),   # logits tile
                pl.BlockSpec((tile_rows, 1), lambda i: (i, 0)),   # labels tile
            ],
            out_specs=pl.BlockSpec((None, 8, 3 * bins_padded),
                                   lambda i: (i, 0, 0)),
        ),
        compiler_params=pltpu.CompilerParams(
            dimension_semantics=("parallel",),
            vmem_limit_bytes=40 * 1024 * 1024,
        ),
        cost_estimate=cost,
    )(logits, labels2d)

    # Tiny finalize in plain JAX: all 8 sublane rows of each partial are
    # identical, so take row 0 and sum across tiles.
    totals = jnp.sum(stats[:, 0, :], axis=0).reshape(3, bins_padded)
    cnt, csum, asum = totals[0], totals[1], totals[2]
    nonempty = cnt > 0.0
    safe_cnt = jnp.where(nonempty, cnt, 1.0)
    prop_in_bin = cnt / jnp.float32(n)
    gap = jnp.abs(csum / safe_cnt - asum / safe_cnt)
    ece = jnp.sum(jnp.where(nonempty, gap * prop_in_bin, 0.0))
    return ece.reshape(1)                                      # matches torch: shape (1,)


def ece_reference(logits, labels, n_bins: int = 15):
    """Pure-JAX reference mirroring the PyTorch module semantics."""
    sm = jax.nn.softmax(logits.astype(jnp.float32), axis=1)
    conf = jnp.max(sm, axis=1)
    pred = jnp.argmax(sm, axis=1)
    acc = (pred == labels).astype(jnp.float32)
    bounds = jnp.arange(n_bins + 1, dtype=jnp.float32) / n_bins
    ece = jnp.zeros((1,), jnp.float32)
    for j in range(n_bins):
        in_bin = jnp.logical_and(conf > bounds[j], conf <= bounds[j + 1])
        cnt = jnp.sum(in_bin.astype(jnp.float32))
        prop = cnt / conf.shape[0]
        safe = jnp.maximum(cnt, 1.0)
        acc_in = jnp.sum(jnp.where(in_bin, acc, 0.0)) / safe
        conf_in = jnp.sum(jnp.where(in_bin, conf, 0.0)) / safe
        ece = ece + jnp.where(cnt > 0, jnp.abs(conf_in - acc_in) * prop, 0.0)
    return ece


if __name__ == "__main__":
    key = jax.random.PRNGKey(0)
    k1, k2 = jax.random.split(key)

    # Test 1: small f32 batch, single tile.
    N, C = 64, 16
    logits = jax.random.normal(k1, (N, C), dtype=jnp.float32) * 3.0
    labels = jax.random.randint(k2, (N,), 0, C, dtype=jnp.int32)
    out = jax.block_until_ready(ece_loss(logits, labels))
    ref = ece_reference(logits, labels)
    assert out.shape == (1,)
    assert jnp.allclose(out, ref, atol=1e-5, rtol=1e-5), (out, ref)

    # Test 2: bf16 logits DMA'd natively (f32 math in-kernel).
    logits_bf16 = logits.astype(jnp.bfloat16)
    out_bf = jax.block_until_ready(ece_loss(logits_bf16, labels))
    ref_bf = ece_reference(logits_bf16.astype(jnp.float32), labels)
    assert jnp.allclose(out_bf, ref_bf, atol=1e-5, rtol=1e-5), (out_bf, ref_bf)

    # Test 3: ragged batch over multiple tiles (exercises the tail mask).
    N2 = 80
    logits2 = jax.random.normal(k1, (N2, C), dtype=jnp.float32) * 3.0
    labels2 = jax.random.randint(k2, (N2,), 0, C, dtype=jnp.int32)
    out2 = jax.block_until_ready(ece_loss(logits2, labels2, max_tile_rows=32))
    ref2 = ece_reference(logits2, labels2)
    assert jnp.allclose(out2, ref2, atol=1e-5, rtol=1e-5), (out2, ref2)

    print("KERNEL_OK")
</pallas_src>

<mosaic_0001>
module attributes {stable_mosaic.version = 11 : i64} {
  func.func @_ece_stats_kernel(%arg0: i32, %arg1: memref<64x16xf32, #tpu.memory_space<vmem>>, %arg2: memref<64x1xi32, #tpu.memory_space<vmem>>, %arg3: memref<1x8x384xf32, #tpu.memory_space<vmem>>) attributes {dimension_semantics = [#tpu.dimension_semantics<parallel>], iteration_bounds = array<i64: 1>, scalar_prefetch = 0 : i64, scratch_operands = 0 : i64, tpu.core_type = #tpu.core_type<tc>, window_params = [{transform_indices = @transform_0, window_bounds = array<i64: 64, 16>}, {transform_indices = @transform_1, window_bounds = array<i64: 64, 1>}, {transform_indices = @transform_2, window_bounds = array<i64: 1, 8, 384>}]} {
    %c0 = arith.constant 0 : index
    %c0_0 = arith.constant 0 : index
    %0 = vector.load %arg1[%c0, %c0_0] : memref<64x16xf32, #tpu.memory_space<vmem>>, vector<64x16xf32>
    %c0_1 = arith.constant 0 : index
    %c0_2 = arith.constant 0 : index
    %1 = vector.load %arg2[%c0_1, %c0_2] : memref<64x1xi32, #tpu.memory_space<vmem>>, vector<64x1xi32>
    %c64_i32 = arith.constant 64 : i32
    %2 = arith.muli %arg0, %c64_i32 : i32
    %3 = tpu.iota {dimensions = array<i32: 0>} : vector<64x1xi32>
    %4 = vector.broadcast %2 : i32 to vector<64x1xi32>
    %5 = arith.addi %4, %3 : vector<64x1xi32>
    %c64_i32_3 = arith.constant 64 : i32
    %6 = vector.broadcast %c64_i32_3 : i32 to vector<64x1xi32>
    %7 = arith.cmpi slt, %5, %6 : vector<64x1xi32>
    %cst = arith.constant dense<0xFF800000> : vector<64xf32>
    %8 = vector.multi_reduction <maximumf>, %0, %cst [1] : vector<64x16xf32> to vector<64xf32>
    %9 = vector.shape_cast %8 : vector<64xf32> to vector<64x1xf32>
    %10 = vector.broadcast %9 : vector<64x1xf32> to vector<64x16xf32>
    %11 = arith.subf %0, %10 : vector<64x16xf32>
    %12 = math.exp %11 : vector<64x16xf32>
    %cst_4 = arith.constant dense<0.000000e+00> : vector<64xf32>
    %13 = vector.multi_reduction <add>, %12, %cst_4 [1] : vector<64x16xf32> to vector<64xf32>
    %14 = vector.shape_cast %13 : vector<64xf32> to vector<64x1xf32>
    %cst_5 = arith.constant 1.000000e+00 : f32
    %15 = vector.broadcast %cst_5 : f32 to vector<64x1xf32>
    %16 = arith.divf %15, %14 : vector<64x1xf32>
    %17 = tpu.iota {dimensions = array<i32: 1>} : vector<64x16xi32>
    %cst_6 = arith.constant 0.000000e+00 : f32
    %18 = vector.broadcast %cst_6 : f32 to vector<64x16xf32>
    %19 = arith.cmpf oeq, %11, %18 : vector<64x16xf32>
    %c16_i32 = arith.constant 16 : i32
    %20 = vector.broadcast %c16_i32 : i32 to vector<64x16xi32>
    %21 = arith.select %19, %17, %20 : vector<64x16xi1>, vector<64x16xi32>
    %cst_7 = arith.constant dense<2147483647> : vector<64xi32>
    %22 = vector.multi_reduction <minsi>, %21, %cst_7 [1] : vector<64x16xi32> to vector<64xi32>
    %23 = vector.shape_cast %22 : vector<64xi32> to vector<64x1xi32>
    %24 = arith.cmpi eq, %23, %1 : vector<64x1xi32>
    %25 = arith.extui %24 : vector<64x1xi1> to vector<64x1xi32>
    %26 = arith.sitofp %25 : vector<64x1xi32> to vector<64x1xf32>
    %cst_8 = arith.constant -1.000000e+00 : f32
    %27 = vector.broadcast %cst_8 : f32 to vector<64x1xf32>
    %28 = arith.select %7, %16, %27 : vector<64x1xi1>, vector<64x1xf32>
    %cst_9 = arith.constant 0.000000e+00 : f32
    %29 = vector.broadcast %cst_9 : f32 to vector<64x1xf32>
    %30 = arith.select %7, %26, %29 : vector<64x1xi1>, vector<64x1xf32>
    %31 = tpu.iota {dimensions = array<i32: 1>} : vector<1x128xi32>
    %32 = arith.sitofp %31 : vector<1x128xi32> to vector<1x128xf32>
    %cst_10 = arith.constant 1.500000e+01 : f32
    %33 = vector.broadcast %cst_10 : f32 to vector<1x128xf32>
    %34 = arith.divf %32, %33 : vector<1x128xf32>
    %cst_11 = arith.constant 1.000000e+00 : f32
    %35 = vector.broadcast %cst_11 : f32 to vector<1x128xf32>
    %36 = arith.addf %32, %35 : vector<1x128xf32>
    %cst_12 = arith.constant 1.500000e+01 : f32
    %37 = vector.broadcast %cst_12 : f32 to vector<1x128xf32>
    %38 = arith.divf %36, %37 : vector<1x128xf32>
    %39 = vector.broadcast %28 : vector<64x1xf32> to vector<64x128xf32>
    %40 = vector.broadcast %34 : vector<1x128xf32> to vector<64x128xf32>
    %41 = arith.cmpf ogt, %39, %40 : vector<64x128xf32>
    %42 = vector.broadcast %28 : vector<64x1xf32> to vector<64x128xf32>
    %43 = vector.broadcast %38 : vector<1x128xf32> to vector<64x128xf32>
    %44 = arith.cmpf ole, %42, %43 : vector<64x128xf32>
    %45 = arith.andi %41, %44 : vector<64x128xi1>
    %46 = arith.extui %45 : vector<64x128xi1> to vector<64x128xi32>
    %47 = arith.sitofp %46 : vector<64x128xi32> to vector<64x128xf32>
    %cst_13 = arith.constant 1.000000e+00 : f32
    %48 = vector.broadcast %cst_13 : f32 to vector<8x64xf32>
    %cst_14 = arith.constant dense<0.000000e+00> : vector<8x128xf32>
    %49 = tpu.matmul %48, %47, %cst_14 {dimension_numbers = #tpu.dot_dimension_numbers<[1], [0], [0], [1], [0, 0, 1, 1], [], []>} : vector<8x64xf32>, vector<64x128xf32>, vector<8x128xf32> -> vector<8x128xf32>
    %50 = vector.broadcast %28 : vector<64x1xf32> to vector<64x128xf32>
    %51 = arith.mulf %50, %47 : vector<64x128xf32>
    %cst_15 = arith.constant dense<0.000000e+00> : vector<8x128xf32>
    %52 = tpu.matmul %48, %51, %cst_15 {dimension_numbers = #tpu.dot_dimension_numbers<[1], [0], [0], [1], [0, 0, 1, 1], [], []>} : vector<8x64xf32>, vector<64x128xf32>, vector<8x128xf32> -> vector<8x128xf32>
    %53 = vector.broadcast %30 : vector<64x1xf32> to vector<64x128xf32>
    %54 = arith.mulf %53, %47 : vector<64x128xf32>
    %cst_16 = arith.constant dense<0.000000e+00> : vector<8x128xf32>
    %55 = tpu.matmul %48, %54, %cst_16 {dimension_numbers = #tpu.dot_dimension_numbers<[1], [0], [0], [1], [0, 0, 1, 1], [], []>} : vector<8x64xf32>, vector<64x128xf32>, vector<8x128xf32> -> vector<8x128xf32>
    %56 = tpu.concatenate %49, %52, %55 in 1 : vector<8x128xf32>, vector<8x128xf32>, vector<8x128xf32> -> vector<8x384xf32>
    %c0_17 = arith.constant 0 : index
    %c0_18 = arith.constant 0 : index
    %c0_19 = arith.constant 0 : index
    %57 = vector.load %arg3[%c0_17, %c0_18, %c0_19] : memref<1x8x384xf32, #tpu.memory_space<vmem>>, vector<1x8x384xf32>
    %58 = vector.shape_cast %57 : vector<1x8x384xf32> to vector<8x384xf32>
    %59 = vector.shape_cast %56 : vector<8x384xf32> to vector<1x8x384xf32>
    tpu.vector_store %arg3[%c0_17, %c0_18, %c0_19], %59 {strides = array<i32>} : memref<1x8x384xf32, #tpu.memory_space<vmem>>, vector<1x8x384xf32>,
    return
  }
  func.func @transform_0(%arg0: i32) -> (i32, i32) {
    %c0_i32 = arith.constant 0 : i32
    %c0_i32_0 = arith.constant 0 : i32
    return %arg0, %c0_i32 : i32, i32
  }
  func.func @transform_1(%arg0: i32) -> (i32, i32) {
    %c0_i32 = arith.constant 0 : i32
    %c0_i32_0 = arith.constant 0 : i32
    return %arg0, %c0_i32 : i32, i32
  }
  func.func @transform_2(%arg0: i32) -> (i32, i32, i32) {
    %c0_i32 = arith.constant 0 : i32
    %c0_i32_0 = arith.constant 0 : i32
    %c0_i32_1 = arith.constant 0 : i32
    return %arg0, %c0_i32, %c0_i32_0 : i32, i32, i32
  }
}

</mosaic_0001>

<llo_original>
// kernel: tpu_custom_call.1
$region0: #{tpu_custom_call.1}
  #allocation0 [shape = 'u32[]', space=smem, size = 0x4, offset = 0x4, fixed_abs, tag = 'smem constant byte address 0x4 - core index']
  #allocation1 [shape = 'u32[144,128]{1,0:T(1,128)}', space=vmem, size = 0x12000, scoped, tag = 'internal scratch']
  %s0 = inlined_call_operand.vmem [shape: f32[64,16], index: 0, kind: input, shape index: {}]
  %s1 = inlined_call_operand.vmem [shape: s32[64,1], index: 1, kind: input, shape index: {}]
  %s2 = inlined_call_operand.hbm [shape: f32[1,8,384], index: 2, kind: output, shape index: {}]
  %s3 = sld [smem:[#allocation0]]
  $region18: #{tpu_custom_call.1} parent=0
    _
  %s5 = ssub.s32 1, %s3
  %s6 = scalar_select 0, %s5, %s3
  $region1: #{tpu_custom_call.1} parent=0
    #allocation2 [shape = 'u8[12288]{0}', space=vmem, size = 0x3000, scoped, tag = 'output window, operand 0, single buffered']
    #allocation3 [shape = 's32[1]{0}', space=sflag, size = 0x4, scoped, tag = 'scoped memory for tpu_custom_call.1']
    %7 = vsyncpa [#allocation3], 0
    // Predicated region
    $region2: #{tpu_custom_call.1} parent=1 // pred_check
      _
    $region3: #{tpu_custom_call.1} parent=1 // pred_check_branch
      %9 = sbr.rel (0) target = $region5
    $region4: #{tpu_custom_call.1} parent=1 // pred_region
      _
    $region5: #{tpu_custom_call.1} parent=1 // pred_fallthru
      _
    // Predicated region
    $region6: #{tpu_custom_call.1} parent=1 // pred_check
      _
    $region7: #{tpu_custom_call.1} parent=1 // pred_check_branch
      %11 = sbr.rel (0) target = $region9
    $region8: #{tpu_custom_call.1} parent=1 // pred_region
      _
    $region9: #{tpu_custom_call.1} parent=1 // pred_fallthru
      _
    %v12 = vld [vmem:[%s0] sm:$0xff]
    %v13 = vld [vmem:[%s0 + $0x8] sm:$0xff]
    %v14 = vld [vmem:[%s0 + $0x10] sm:$0xff]
    %v15 = vld [vmem:[%s0 + $0x18] sm:$0xff]
    %v16 = vld [vmem:[%s0 + $0x20] sm:$0xff]
    %v17 = vld [vmem:[%s0 + $0x28] sm:$0xff]
    %v18 = vld [vmem:[%s0 + $0x30] sm:$0xff]
    %v19 = vld [vmem:[%s0 + $0x38] sm:$0xff]
    %v20 = vld [vmem:[%s1] sm:$0xff]
    %v21 = vld [vmem:[%s1 + $0x8] sm:$0xff]
    %v22 = vld [vmem:[%s1 + $0x10] sm:$0xff]
    %v23 = vld [vmem:[%s1 + $0x18] sm:$0xff]
    %v24 = vld [vmem:[%s1 + $0x20] sm:$0xff]
    %v25 = vld [vmem:[%s1 + $0x28] sm:$0xff]
    %v26 = vld [vmem:[%s1 + $0x30] sm:$0xff]
    %v27 = vld [vmem:[%s1 + $0x38] sm:$0xff]
    %s28 = smul.u32 0, 64
    %v29 = vlaneseq
    %v30 = vshrl.u32 %v29, 7
    %v31 = vadd.s32 %v30, 8
    %v32 = vadd.s32 %v30, 16
    %v33 = vadd.s32 %v30, 24
    %v34 = vadd.s32 %v30, 32
    %v35 = vadd.s32 %v30, 40
    %v36 = vadd.s32 %v30, 48
    %v37 = vadd.s32 %v30, 56
    %v38 = vstv %s28
    %v39 = vadd.s32 %v38, %v30
    %v40 = vadd.s32 %v38, %v31
    %v41 = vadd.s32 %v38, %v32
    %v42 = vadd.s32 %v38, %v33
    %v43 = vadd.s32 %v38, %v34
    %v44 = vadd.s32 %v38, %v35
    %v45 = vadd.s32 %v38, %v36
    %v46 = vadd.s32 %v38, %v37
    %vm47 = vcmp.lt.s32.totalorder %v39, 64
    %vm48 = vcmp.lt.s32.totalorder %v40, 64
    %vm49 = vcmp.lt.s32.totalorder %v41, 64
    %vm50 = vcmp.lt.s32.totalorder %v42, 64
    %vm51 = vcmp.lt.s32.totalorder %v43, 64
    %vm52 = vcmp.lt.s32.totalorder %v44, 64
    %vm53 = vcmp.lt.s32.totalorder %v45, 64
    %vm54 = vcmp.lt.s32.totalorder %v46, 64
    %vm55 = vcmask 130048
    %v56 = vsel %vm55, %v12, -inf
    %57 = vmax.xlane.f32.xlu0 %v56
    %v58 = vpop.xlane.xlu0 %57
    %v59 = vsel %vm55, %v13, -inf
    %60 = vmax.xlane.f32.xlu0 %v59
    %v61 = vpop.xlane.xlu0 %60
    %v62 = vsel %vm55, %v14, -inf
    %63 = vmax.xlane.f32.xlu0 %v62
    %v64 = vpop.xlane.xlu0 %63
    %v65 = vsel %vm55, %v15, -inf
    %66 = vmax.xlane.f32.xlu0 %v65
    %v67 = vpop.xlane.xlu0 %66
    %v68 = vsel %vm55, %v16, -inf
    %69 = vmax.xlane.f32.xlu0 %v68
    %v70 = vpop.xlane.xlu0 %69
    %v71 = vsel %vm55, %v17, -inf
    %72 = vmax.xlane.f32.xlu0 %v71
    %v73 = vpop.xlane.xlu0 %72
    %v74 = vsel %vm55, %v18, -inf
    %75 = vmax.xlane.f32.xlu0 %v74
    %v76 = vpop.xlane.xlu0 %75
    %v77 = vsel %vm55, %v19, -inf
    %78 = vmax.xlane.f32.xlu0 %v77
    %v79 = vpop.xlane.xlu0 %78
    %v80 = vsub.f32 %v12, %v58
    %v81 = vsub.f32 %v13, %v61
    %v82 = vsub.f32 %v14, %v64
    %v83 = vsub.f32 %v15, %v67
    %v84 = vsub.f32 %v16, %v70
    %v85 = vsub.f32 %v17, %v73
    %v86 = vsub.f32 %v18, %v76
    %v87 = vsub.f32 %v19, %v79
    %v88 = vmul.f32 %v80, 1.442695
    %v89 = vpow.pop %v88
    %v90 = vmul.f32 %v81, 1.442695
    %v91 = vpow.pop %v90
    %v92 = vmul.f32 %v82, 1.442695
    %v93 = vpow.pop %v92
    %v94 = vmul.f32 %v83, 1.442695
    %v95 = vpow.pop %v94
    %v96 = vmul.f32 %v84, 1.442695
    %v97 = vpow.pop %v96
    %v98 = vmul.f32 %v85, 1.442695
    %v99 = vpow.pop %v98
    %v100 = vmul.f32 %v86, 1.442695
    %v101 = vpow.pop %v100
    %v102 = vmul.f32 %v87, 1.442695
    %v103 = vpow.pop %v102
    %v104 = vsel %vm55, %v89, 0.0
    %105 = vadd.xlane.f32.xlu0 %v104
    %v106 = vpop.xlane.xlu0 %105
    %v107 = vsel %vm55, %v91, 0.0
    %108 = vadd.xlane.f32.xlu0 %v107
    %v109 = vpop.xlane.xlu0 %108
    %v110 = vsel %vm55, %v93, 0.0
    %111 = vadd.xlane.f32.xlu0 %v110
    %v112 = vpop.xlane.xlu0 %111
    %v113 = vsel %vm55, %v95, 0.0
    %114 = vadd.xlane.f32.xlu0 %v113
    %v115 = vpop.xlane.xlu0 %114
    %v116 = vsel %vm55, %v97, 0.0
    %117 = vadd.xlane.f32.xlu0 %v116
    %v118 = vpop.xlane.xlu0 %117
    %v119 = vsel %vm55, %v99, 0.0
    %120 = vadd.xlane.f32.xlu0 %v119
    %v121 = vpop.xlane.xlu0 %120
    %v122 = vsel %vm55, %v101, 0.0
    %123 = vadd.xlane.f32.xlu0 %v122
    %v124 = vpop.xlane.xlu0 %123
    %v125 = vsel %vm55, %v103, 0.0
    %126 = vadd.xlane.f32.xlu0 %v125
    %v127 = vpop.xlane.xlu0 %126
    %v128 = vrcp.pop %v106
    %v129 = vmul.f32 1.0, %v128
    %v130 = vrcp.pop %v109
    %v131 = vmul.f32 1.0, %v130
    %v132 = vrcp.pop %v112
    %v133 = vmul.f32 1.0, %v132
    %v134 = vrcp.pop %v115
    %v135 = vmul.f32 1.0, %v134
    %v136 = vrcp.pop %v118
    %v137 = vmul.f32 1.0, %v136
    %v138 = vrcp.pop %v121
    %v139 = vmul.f32 1.0, %v138
    %v140 = vrcp.pop %v124
    %v141 = vmul.f32 1.0, %v140
    %v142 = vrcp.pop %v127
    %v143 = vmul.f32 1.0, %v142
    %v144 = vlaneseq
    %v145 = vand.u32 %v144, 127
    %vm146 = vcmp.eq.f32.partialorder %v80, 0.0
    %vm147 = vcmp.eq.f32.partialorder %v81, 0.0
    %vm148 = vcmp.eq.f32.partialorder %v82, 0.0
    %vm149 = vcmp.eq.f32.partialorder %v83, 0.0
    %vm150 = vcmp.eq.f32.partialorder %v84, 0.0
    %vm151 = vcmp.eq.f32.partialorder %v85, 0.0
    %vm152 = vcmp.eq.f32.partialorder %v86, 0.0
    %vm153 = vcmp.eq.f32.partialorder %v87, 0.0
    %v154 = vsel %vm146, %v145, 16
    %v155 = vsel %vm147, %v145, 16
    %v156 = vsel %vm148, %v145, 16
    %v157 = vsel %vm149, %v145, 16
    %v158 = vsel %vm150, %v145, 16
    %v159 = vsel %vm151, %v145, 16
    %v160 = vsel %vm152, %v145, 16
    %v161 = vsel %vm153, %v145, 16
    %v162 = vsel %vm55, %v154, 2147483647
    %v163 = vand.u32 %v162, 65535
    %v164 = vshra.s32 %v162, 16
    %v165 = vcvt.s32.f32 %v163
    %v166 = vcvt.s32.f32 %v164
    %167 = vmin.xlane.f32.xlu0 %v166
    %v168 = vpop.xlane.xlu0 %167
    %vm169 = vcmp.eq.f32.partialorder %v166, %v168
    %v170 = vsel %vm169, %v165, inf
    %171 = vmin.xlane.f32.xlu0 %v170
    %v172 = vpop.xlane.xlu0 %171
    %v173 = vcvt.f32.s32 %v172
    %v174 = vcvt.f32.s32 %v168
    %v175 = vshll.u32 %v174, 16
    %v176 = vadd.s32 %v175, %v173
    %v177 = vsel %vm55, %v155, 2147483647
    %v178 = vand.u32 %v177, 65535
    %v179 = vshra.s32 %v177, 16
    %v180 = vcvt.s32.f32 %v178
    %v181 = vcvt.s32.f32 %v179
    %182 = vmin.xlane.f32.xlu0 %v181
    %v183 = vpop.xlane.xlu0 %182
    %vm184 = vcmp.eq.f32.partialorder %v181, %v183
    %v185 = vsel %vm184, %v180, inf
    %186 = vmin.xlane.f32.xlu0 %v185
    %v187 = vpop.xlane.xlu0 %186
    %v188 = vcvt.f32.s32 %v187
    %v189 = vcvt.f32.s32 %v183
    %v190 = vshll.u32 %v189, 16
    %v191 = vadd.s32 %v190, %v188
    %v192 = vsel %vm55, %v156, 2147483647
    %v193 = vand.u32 %v192, 65535
    %v194 = vshra.s32 %v192, 16
    %v195 = vcvt.s32.f32 %v193
    %v196 = vcvt.s32.f32 %v194
    %197 = vmin.xlane.f32.xlu0 %v196
    %v198 = vpop.xlane.xlu0 %197
    %vm199 = vcmp.eq.f32.partialorder %v196, %v198
    %v200 = vsel %vm199, %v195, inf
    %201 = vmin.xlane.f32.xlu0 %v200
    %v202 = vpop.xlane.xlu0 %201
    %v203 = vcvt.f32.s32 %v202
    %v204 = vcvt.f32.s32 %v198
    %v205 = vshll.u32 %v204, 16
    %v206 = vadd.s32 %v205, %v203
    %v207 = vsel %vm55, %v157, 2147483647
    %v208 = vand.u32 %v207, 65535
    %v209 = vshra.s32 %v207, 16
    %v210 = vcvt.s32.f32 %v208
    %v211 = vcvt.s32.f32 %v209
    %212 = vmin.xlane.f32.xlu0 %v211
    %v213 = vpop.xlane.xlu0 %212
    %vm214 = vcmp.eq.f32.partialorder %v211, %v213
    %v215 = vsel %vm214, %v210, inf
    %216 = vmin.xlane.f32.xlu0 %v215
    %v217 = vpop.xlane.xlu0 %216
    %v218 = vcvt.f32.s32 %v217
    %v219 = vcvt.f32.s32 %v213
    %v220 = vshll.u32 %v219, 16
    %v221 = vadd.s32 %v220, %v218
    %v222 = vsel %vm55, %v158, 2147483647
    %v223 = vand.u32 %v222, 65535
    %v224 = vshra.s32 %v222, 16
    %v225 = vcvt.s32.f32 %v223
    %v226 = vcvt.s32.f32 %v224
    %227 = vmin.xlane.f32.xlu0 %v226
    %v228 = vpop.xlane.xlu0 %227
    %vm229 = vcmp.eq.f32.partialorder %v226, %v228
    %v230 = vsel %vm229, %v225, inf
    %231 = vmin.xlane.f32.xlu0 %v230
    %v232 = vpop.xlane.xlu0 %231
    %v233 = vcvt.f32.s32 %v232
    %v234 = vcvt.f32.s32 %v228
    %v235 = vshll.u32 %v234, 16
    %v236 = vadd.s32 %v235, %v233
    %v237 = vsel %vm55, %v159, 2147483647
    %v238 = vand.u32 %v237, 65535
    %v239 = vshra.s32 %v237, 16
    %v240 = vcvt.s32.f32 %v238
    %v241 = vcvt.s32.f32 %v239
    %242 = vmin.xlane.f32.xlu0 %v241
    %v243 = vpop.xlane.xlu0 %242
    %vm244 = vcmp.eq.f32.partialorder %v241, %v243
    %v245 = vsel %vm244, %v240, inf
    %246 = vmin.xlane.f32.xlu0 %v245
    %v247 = vpop.xlane.xlu0 %246
    %v248 = vcvt.f32.s32 %v247
    %v249 = vcvt.f32.s32 %v243
    %v250 = vshll.u32 %v249, 16
    %v251 = vadd.s32 %v250, %v248
    %v252 = vsel %vm55, %v160, 2147483647
    %v253 = vand.u32 %v252, 65535
    %v254 = vshra.s32 %v252, 16
    %v255 = vcvt.s32.f32 %v253
    %v256 = vcvt.s32.f32 %v254
    %257 = vmin.xlane.f32.xlu0 %v256
    %v258 = vpop.xlane.xlu0 %257
    %vm259 = vcmp.eq.f32.partialorder %v256, %v258
    %v260 = vsel %vm259, %v255, inf
    %261 = vmin.xlane.f32.xlu0 %v260
    %v262 = vpop.xlane.xlu0 %261
    %v263 = vcvt.f32.s32 %v262
    %v264 = vcvt.f32.s32 %v258
    %v265 = vshll.u32 %v264, 16
    %v266 = vadd.s32 %v265, %v263
    %v267 = vsel %vm55, %v161, 2147483647
    %v268 = vand.u32 %v267, 65535
    %v269 = vshra.s32 %v267, 16
    %v270 = vcvt.s32.f32 %v268
    %v271 = vcvt.s32.f32 %v269
    %272 = vmin.xlane.f32.xlu0 %v271
    %v273 = vpop.xlane.xlu0 %272
    %vm274 = vcmp.eq.f32.partialorder %v271, %v273
    %v275 = vsel %vm274, %v270, inf
    %276 = vmin.xlane.f32.xlu0 %v275
    %v277 = vpop.xlane.xlu0 %276
    %v278 = vcvt.f32.s32 %v277
    %v279 = vcvt.f32.s32 %v273
    %v280 = vshll.u32 %v279, 16
    %v281 = vadd.s32 %v280, %v278
    %vm282 = vcmp.eq.s32.totalorder %v176, %v20
    %vm283 = vcmp.eq.s32.totalorder %v191, %v21
    %vm284 = vcmp.eq.s32.totalorder %v206, %v22
    %vm285 = vcmp.eq.s32.totalorder %v221, %v23
    %vm286 = vcmp.eq.s32.totalorder %v236, %v24
    %vm287 = vcmp.eq.s32.totalorder %v251, %v25
    %vm288 = vcmp.eq.s32.totalorder %v266, %v26
    %vm289 = vcmp.eq.s32.totalorder %v281, %v27
    %v290 = vsel %vm282, 1, 0
    %v291 = vsel %vm283, 1, 0
    %v292 = vsel %vm284, 1, 0
    %v293 = vsel %vm285, 1, 0
    %v294 = vsel %vm286, 1, 0
    %v295 = vsel %vm287, 1, 0
    %v296 = vsel %vm288, 1, 0
    %v297 = vsel %vm289, 1, 0
    %v298 = vcvt.s32.f32 %v290
    %v299 = vcvt.s32.f32 %v291
    %v300 = vcvt.s32.f32 %v292
    %v301 = vcvt.s32.f32 %v293
    %v302 = vcvt.s32.f32 %v294
    %v303 = vcvt.s32.f32 %v295
    %v304 = vcvt.s32.f32 %v296
    %v305 = vcvt.s32.f32 %v297
    %v306 = vsel %vm47, %v129, -1.0
    %v307 = vsel %vm48, %v131, -1.0
    %v308 = vsel %vm49, %v133, -1.0
    %v309 = vsel %vm50, %v135, -1.0
    %v310 = vsel %vm51, %v137, -1.0
    %v311 = vsel %vm52, %v139, -1.0
    %v312 = vsel %vm53, %v141, -1.0
    %v313 = vsel %vm54, %v143, -1.0
    %v314 = vsel %vm47, %v298, 0.0
    %v315 = vsel %vm48, %v299, 0.0
    %v316 = vsel %vm49, %v300, 0.0
    %v317 = vsel %vm50, %v301, 0.0
    %v318 = vsel %vm51, %v302, 0.0
    %v319 = vsel %vm52, %v303, 0.0
    %v320 = vsel %vm53, %v304, 0.0
    %v321 = vsel %vm54, %v305, 0.0
    %v322 = vcvt.s32.f32 %v145
    %v323 = vrcp.pop 15.0
    %v324 = vmul.f32 %v322, %v323
    %v325 = vadd.f32 %v322, 1.0
    %v326 = vmul.f32 %v325, %v323
    %vm327 = vcmp.gt.f32.partialorder %v306, %v324
    %vm328 = vcmp.gt.f32.partialorder %v307, %v324
    %vm329 = vcmp.gt.f32.partialorder %v308, %v324
    %vm330 = vcmp.gt.f32.partialorder %v309, %v324
    %vm331 = vcmp.gt.f32.partialorder %v310, %v324
    %vm332 = vcmp.gt.f32.partialorder %v311, %v324
    %vm333 = vcmp.gt.f32.partialorder %v312, %v324
    %vm334 = vcmp.gt.f32.partialorder %v313, %v324
    %vm335 = vcmp.le.f32.partialorder %v306, %v326
    %vm336 = vcmp.le.f32.partialorder %v307, %v326
    %vm337 = vcmp.le.f32.partialorder %v308, %v326
    %vm338 = vcmp.le.f32.partialorder %v309, %v326
    %vm339 = vcmp.le.f32.partialorder %v310, %v326
    %vm340 = vcmp.le.f32.partialorder %v311, %v326
    %vm341 = vcmp.le.f32.partialorder %v312, %v326
    %vm342 = vcmp.le.f32.partialorder %v313, %v326
    %vm343 = vmand %vm327, %vm335
    %vm344 = vmand %vm328, %vm336
    %vm345 = vmand %vm329, %vm337
    %vm346 = vmand %vm330, %vm338
    %vm347 = vmand %vm331, %vm339
    %vm348 = vmand %vm332, %vm340
    %vm349 = vmand %vm333, %vm341
    %vm350 = vmand %vm334, %vm342
    %v351 = vsel %vm343, 1, 0
    %v352 = vsel %vm344, 1, 0
    %v353 = vsel %vm345, 1, 0
    %v354 = vsel %vm346, 1, 0
    %v355 = vsel %vm347, 1, 0
    %v356 = vsel %vm348, 1, 0
    %v357 = vsel %vm349, 1, 0
    %v358 = vsel %vm350, 1, 0
    %v359 = vcvt.s32.f32 %v351
    %v360 = vcvt.s32.f32 %v352
    %v361 = vcvt.s32.f32 %v353
    %v362 = vcvt.s32.f32 %v354
    %v363 = vcvt.s32.f32 %v355
    %v364 = vcvt.s32.f32 %v356
    %v365 = vcvt.s32.f32 %v357
    %v366 = vcvt.s32.f32 %v358
    %vm367 = vcmask 523264
    %v369 = vsel %vm367, 1.0, 0
    %371 = vmatprep.subr.mxu0 0.0
    %372 = vmatpush1.msra.mxu0 0.0
    %373 = vmatprep.subr.mxu0 0.0
    %374 = vmatpush1.msra.mxu0 0.0
    %375 = vmatprep.subr.mxu0 0.0
    %376 = vmatpush1.msra.mxu0 0.0
    %377 = vmatprep.subr.mxu0 0.0
    %378 = vmatpush1.msra.mxu0 0.0
    %379 = vmatprep.subr.mxu0 0.0
    %380 = vmatpush1.msra.mxu0 0.0
    %381 = vmatprep.subr.mxu0 0.0
    %382 = vmatpush1.msra.mxu0 0.0
    %383 = vmatprep.subr.mxu0 0.0
    %384 = vmatpush1.msra.mxu0 0.0
    %385 = vmatprep.subr.mxu0 0.0
    %386 = vmatpush1.msra.mxu0 0.0
    %387 = vmatprep.subr.mxu0 0.0
    %388 = vmatpush1.msra.mxu0 %v366
    %389 = vmatprep.subr.mxu0 0.0
    %390 = vmatpush1.msra.mxu0 %v365
    %391 = vmatprep.subr.mxu0 0.0
    %392 = vmatpush1.msra.mxu0 %v364
    %393 = vmatprep.subr.mxu0 0.0
    %394 = vmatpush1.msra.mxu0 %v363
    %395 = vmatprep.subr.mxu0 0.0
    %396 = vmatpush1.msra.mxu0 %v362
    %397 = vmatprep.subr.mxu0 0.0
    %398 = vmatpush1.msra.mxu0 %v361
    %399 = vmatprep.subr.mxu0 0.0
    %400 = vmatpush1.msra.mxu0 %v360
    %401 = vmatprep.subr.mxu0 0.0
    %402 = vmatpush1.msra.mxu0 %v359
    %403 = vmatprep.subr.mxu0 0.0
    %404 = vmatpush2.msra.mxu0 0.0
    %405 = vmatprep.subr.mxu0 0.0
    %406 = vmatpush2.msra.mxu0 0.0
    %407 = vmatprep.subr.mxu0 0.0
    %408 = vmatpush2.msra.mxu0 0.0
    %409 = vmatprep.subr.mxu0 0.0
    %410 = vmatpush2.msra.mxu0 0.0
    %411 = vmatprep.subr.mxu0 0.0
    %412 = vmatpush2.msra.mxu0 0.0
    %413 = vmatprep.subr.mxu0 0.0
    %414 = vmatpush2.msra.mxu0 0.0
    %415 = vmatprep.subr.mxu0 0.0
    %416 = vmatpush2.msra.mxu0 0.0
    %417 = vmatprep.subr.mxu0 0.0
    %418 = vmatpush2.msra.mxu0 0.0
    %419 = vmatprep.subr.mxu0 0.0
    %420 = vmatpush2.msra.mxu0 0.0
    %421 = vmatprep.subr.mxu0 0.0
    %422 = vmatpush2.msra.mxu0 0.0
    %423 = vmatprep.subr.mxu0 0.0
    %424 = vmatpush2.msra.mxu0 0.0
    %425 = vmatprep.subr.mxu0 0.0
    %426 = vmatpush2.msra.mxu0 0.0
    %427 = vmatprep.subr.mxu0 0.0
    %428 = vmatpush2.msra.mxu0 0.0
    %429 = vmatprep.subr.mxu0 0.0
    %430 = vmatpush2.msra.mxu0 0.0
    %431 = vmatprep.subr.mxu0 0.0
    %432 = vmatpush2.msra.mxu0 0.0
    %433 = vmatprep.subr.mxu0 0.0
    %434 = vmatpush2.msra.mxu0 0.0
    %435 = vmatprep.mubr.f32.mxu0 0.0
    %436 = vmatmul.mubr.f32.gmra.mxu0 %v369
    %v437 = vpop.f32.mrf.mxu0
    %v438 = vadd.f32 0.0, %v437
    %v439 = vpop.f32.mrf.mxu0
    %440 = vdwg.mxu0
    %v441 = vmul.f32 %v306, %v359
    %v442 = vmul.f32 %v307, %v360
    %v443 = vmul.f32 %v308, %v361
    %v444 = vmul.f32 %v309, %v362
    %v445 = vmul.f32 %v310, %v363
    %v446 = vmul.f32 %v311, %v364
    %v447 = vmul.f32 %v312, %v365
    %v448 = vmul.f32 %v313, %v366
    %449 = vmatprep.subr.mxu0 0.0
    %450 = vmatpush1.msra.mxu0 0.0
    %451 = vmatprep.subr.mxu0 0.0
    %452 = vmatpush1.msra.mxu0 0.0
    %453 = vmatprep.subr.mxu0 0.0
    %454 = vmatpush1.msra.mxu0 0.0
    %455 = vmatprep.subr.mxu0 0.0
    %456 = vmatpush1.msra.mxu0 0.0
    %457 = vmatprep.subr.mxu0 0.0
    %458 = vmatpush1.msra.mxu0 0.0
    %459 = vmatprep.subr.mxu0 0.0
    %460 = vmatpush1.msra.mxu0 0.0
    %461 = vmatprep.subr.mxu0 0.0
    %462 = vmatpush1.msra.mxu0 0.0
    %463 = vmatprep.subr.mxu0 0.0
    %464 = vmatpush1.msra.mxu0 0.0
    %465 = vmatprep.subr.mxu0 0.0
    %466 = vmatpush1.msra.mxu0 %v448
    %467 = vmatprep.subr.mxu0 0.0
    %468 = vmatpush1.msra.mxu0 %v447
    %469 = vmatprep.subr.mxu0 0.0
    %470 = vmatpush1.msra.mxu0 %v446
    %471 = vmatprep.subr.mxu0 0.0
    %472 = vmatpush1.msra.mxu0 %v445
    %473 = vmatprep.subr.mxu0 0.0
    %474 = vmatpush1.msra.mxu0 %v444
    %475 = vmatprep.subr.mxu0 0.0
    %476 = vmatpush1.msra.mxu0 %v443
    %477 = vmatprep.subr.mxu0 0.0
    %478 = vmatpush1.msra.mxu0 %v442
    %479 = vmatprep.subr.mxu0 0.0
    %480 = vmatpush1.msra.mxu0 %v441
    %481 = vmatprep.subr.mxu0 0.0
    %482 = vmatpush2.msra.mxu0 0.0
    %483 = vmatprep.subr.mxu0 0.0
    %484 = vmatpush2.msra.mxu0 0.0
    %485 = vmatprep.subr.mxu0 0.0
    %486 = vmatpush2.msra.mxu0 0.0
    %487 = vmatprep.subr.mxu0 0.0
    %488 = vmatpush2.msra.mxu0 0.0
    %489 = vmatprep.subr.mxu0 0.0
    %490 = vmatpush2.msra.mxu0 0.0
    %491 = vmatprep.subr.mxu0 0.0
    %492 = vmatpush2.msra.mxu0 0.0
    %493 = vmatprep.subr.mxu0 0.0
    %494 = vmatpush2.msra.mxu0 0.0
    %495 = vmatprep.subr.mxu0 0.0
    %496 = vmatpush2.msra.mxu0 0.0
    %497 = vmatprep.subr.mxu0 0.0
    %498 = vmatpush2.msra.mxu0 0.0
    %499 = vmatprep.subr.mxu0 0.0
    %500 = vmatpush2.msra.mxu0 0.0
    %501 = vmatprep.subr.mxu0 0.0
    %502 = vmatpush2.msra.mxu0 0.0
    %503 = vmatprep.subr.mxu0 0.0
    %504 = vmatpush2.msra.mxu0 0.0
    %505 = vmatprep.subr.mxu0 0.0
    %506 = vmatpush2.msra.mxu0 0.0
    %507 = vmatprep.subr.mxu0 0.0
    %508 = vmatpush2.msra.mxu0 0.0
    %509 = vmatprep.subr.mxu0 0.0
    %510 = vmatpush2.msra.mxu0 0.0
    %511 = vmatprep.subr.mxu0 0.0
    %512 = vmatpush2.msra.mxu0 0.0
    %513 = vmatprep.mubr.f32.mxu0 0.0
    %514 = vmatmul.mubr.f32.gmra.mxu0 %v369
    %v515 = vpop.f32.mrf.mxu0
    %v516 = vadd.f32 0.0, %v515
    %v517 = vpop.f32.mrf.mxu0
    %518 = vdwg.mxu0
    %520 = vset.pattern.permute.xlu0 0
    %521 = vperm.xlu0 %520, %v314
    %v522 = vpop.permute.xlu0 %521
    %525 = vset.pattern.permute.xlu0 0
    %526 = vperm.xlu0 %525, %v315
    %v527 = vpop.permute.xlu0 %526
    %530 = vset.pattern.permute.xlu0 0
    %531 = vperm.xlu0 %530, %v316
    %v532 = vpop.permute.xlu0 %531
    %535 = vset.pattern.permute.xlu0 0
    %536 = vperm.xlu0 %535, %v317
    %v537 = vpop.permute.xlu0 %536
    %540 = vset.pattern.permute.xlu0 0
    %541 = vperm.xlu0 %540, %v318
    %v542 = vpop.permute.xlu0 %541
    %545 = vset.pattern.permute.xlu0 0
    %546 = vperm.xlu0 %545, %v319
    %v547 = vpop.permute.xlu0 %546
    %550 = vset.pattern.permute.xlu0 0
    %551 = vperm.xlu0 %550, %v320
    %v552 = vpop.permute.xlu0 %551
    %555 = vset.pattern.permute.xlu0 0
    %556 = vperm.xlu0 %555, %v321
    %v557 = vpop.permute.xlu0 %556
    %v559 = vmul.f32 %v522, %v359
    %v560 = vmul.f32 %v527, %v360
    %v561 = vmul.f32 %v532, %v361
    %v562 = vmul.f32 %v537, %v362
    %v563 = vmul.f32 %v542, %v363
    %v564 = vmul.f32 %v547, %v364
    %v565 = vmul.f32 %v552, %v365
    %v566 = vmul.f32 %v557, %v366
    %567 = vmatprep.subr.mxu0 0.0
    %568 = vmatpush1.msra.mxu0 0.0
    %569 = vmatprep.subr.mxu0 0.0
    %570 = vmatpush1.msra.mxu0 0.0
    %571 = vmatprep.subr.mxu0 0.0
    %572 = vmatpush1.msra.mxu0 0.0
    %573 = vmatprep.subr.mxu0 0.0
    %574 = vmatpush1.msra.mxu0 0.0
    %575 = vmatprep.subr.mxu0 0.0
    %576 = vmatpush1.msra.mxu0 0.0
    %577 = vmatprep.subr.mxu0 0.0
    %578 = vmatpush1.msra.mxu0 0.0
    %579 = vmatprep.subr.mxu0 0.0
    %580 = vmatpush1.msra.mxu0 0.0
    %581 = vmatprep.subr.mxu0 0.0
    %582 = vmatpush1.msra.mxu0 0.0
    %583 = vmatprep.subr.mxu0 0.0
    %584 = vmatpush1.msra.mxu0 %v566
    %585 = vmatprep.subr.mxu0 0.0
    %586 = vmatpush1.msra.mxu0 %v565
    %587 = vmatprep.subr.mxu0 0.0
    %588 = vmatpush1.msra.mxu0 %v564
    %589 = vmatprep.subr.mxu0 0.0
    %590 = vmatpush1.msra.mxu0 %v563
    %591 = vmatprep.subr.mxu0 0.0
    %592 = vmatpush1.msra.mxu0 %v562
    %593 = vmatprep.subr.mxu0 0.0
    %594 = vmatpush1.msra.mxu0 %v561
    %595 = vmatprep.subr.mxu0 0.0
    %596 = vmatpush1.msra.mxu0 %v560
    %597 = vmatprep.subr.mxu0 0.0
    %598 = vmatpush1.msra.mxu0 %v559
    %599 = vmatprep.subr.mxu0 0.0
    %600 = vmatpush2.msra.mxu0 0.0
    %601 = vmatprep.subr.mxu0 0.0
    %602 = vmatpush2.msra.mxu0 0.0
    %603 = vmatprep.subr.mxu0 0.0
    %604 = vmatpush2.msra.mxu0 0.0
    %605 = vmatprep.subr.mxu0 0.0
    %606 = vmatpush2.msra.mxu0 0.0
    %607 = vmatprep.subr.mxu0 0.0
    %608 = vmatpush2.msra.mxu0 0.0
    %609 = vmatprep.subr.mxu0 0.0
    %610 = vmatpush2.msra.mxu0 0.0
    %611 = vmatprep.subr.mxu0 0.0
    %612 = vmatpush2.msra.mxu0 0.0
    %613 = vmatprep.subr.mxu0 0.0
    %614 = vmatpush2.msra.mxu0 0.0
    %615 = vmatprep.subr.mxu0 0.0
    %616 = vmatpush2.msra.mxu0 0.0
    %617 = vmatprep.subr.mxu0 0.0
    %618 = vmatpush2.msra.mxu0 0.0
    %619 = vmatprep.subr.mxu0 0.0
    %620 = vmatpush2.msra.mxu0 0.0
    %621 = vmatprep.subr.mxu0 0.0
    %622 = vmatpush2.msra.mxu0 0.0
    %623 = vmatprep.subr.mxu0 0.0
    %624 = vmatpush2.msra.mxu0 0.0
    %625 = vmatprep.subr.mxu0 0.0
    %626 = vmatpush2.msra.mxu0 0.0
    %627 = vmatprep.subr.mxu0 0.0
    %628 = vmatpush2.msra.mxu0 0.0
    %629 = vmatprep.subr.mxu0 0.0
    %630 = vmatpush2.msra.mxu0 0.0
    %631 = vmatprep.mubr.f32.mxu0 0.0
    %632 = vmatmul.mubr.f32.gmra.mxu0 %v369
    %v633 = vpop.f32.mrf.mxu0
    %v634 = vadd.f32 0.0, %v633
    %v635 = vpop.f32.mrf.mxu0
    %636 = vdwg.mxu0
    %637 = vst [vmem:[#allocation2] sm:$0xff] %v438
    %638 = vst [vmem:[#allocation2 + $0x8] sm:$0xff] %v516
    %639 = vst [vmem:[#allocation2 + $0x10] sm:$0xff] %v634
    // Predicated region
    $region10: #{tpu_custom_call.1} parent=1 // pred_check
      _
    $region11: #{tpu_custom_call.1} parent=1 // pred_check_branch
      %641 = sbr.rel (0) target = $region13
    $region12: #{tpu_custom_call.1} parent=1 // pred_region
      %s643 = ssub.s32 384, 384
      %644 = vsyncadd [#allocation3], %s643
      %s646 = sshll.u32 [#allocation2], 4
      %s647 = int_to_ptr.vmem [resolvable:$true] %s646
      %649 = dma.vmem_to_hbm [thread:$0]  %s647, 384, %s2, [#allocation3]
    $region13: #{tpu_custom_call.1} parent=1 // pred_fallthru
      _
    // Predicated region
    $region14: #{tpu_custom_call.1} parent=1 // pred_check
      _
    $region15: #{tpu_custom_call.1} parent=1 // pred_check_branch
      %651 = sbr.rel (0) target = $region17
    $region16: #{tpu_custom_call.1} parent=1 // pred_region
      %652 = dma.done [#allocation3], 384
    $region17: #{tpu_custom_call.1} parent=1 // pred_fallthru
      _
    %653 = vsyncpa [#allocation3], 1

</llo_original>
